<compile_context>
chip_gen: v6e
topology: v6e:2x2x1
jax: 0.10.0
libtpu: 0.0.40
codegen_flags: <defaults>
</compile_context>

<pallas_src>
import functools

import jax
import jax.numpy as jnp
from jax.experimental import pallas as pl
from jax.experimental.pallas import tpu as pltpu


# ------------------------------- kernel ------------------------------------ #

def _layernorm_kernel(x_ref, g_ref, b_ref, o_ref, *, eps):
    # x_ref: (tm, D)   g_ref / b_ref: (1, D)   o_ref: (tm, D)
    x = x_ref[...].astype(jnp.float32)
    g = g_ref[...].astype(jnp.float32)
    b = b_ref[...].astype(jnp.float32)

    # One pass over the tile for both moments.
    mean = jnp.mean(x, axis=-1, keepdims=True)
    mean_sq = jnp.mean(x * x, axis=-1, keepdims=True)
    var = jnp.maximum(mean_sq - mean * mean, 0.0)
    inv = jax.lax.rsqrt(var + eps)

    # y = (x - mean) * inv * g + b  ==  x * scale + (b - mean * scale)
    scale = inv * g
    shift = b - mean * scale
    o_ref[...] = (x * scale + shift).astype(o_ref.dtype)


# ----------------------------- tile sizing ---------------------------------- #

def _floor8(n):
    return (n // 8) * 8


def _pick_row_tile(M, D, itemsize, *, n_io_streams=2, n_f32_temps=4):
    """Choose the token-tile height and an explicit VMEM limit.

    Accounting: each I/O stream (1 input + 1 output) is double-buffered in the
    caller dtype; the kernel additionally materializes ~n_f32_temps tile-sized
    f32 temporaries.  Blocks are bounded to ~50% of the scoped limit to leave
    headroom for compiler scratch.
    """
    try:
        physical = int(pltpu.get_tpu_info().vmem_capacity_bytes)
    except Exception:
        physical = 64 * 1024 * 1024          # safe lower bound (v7x per-TC)

    vmem_limit = min((physical * 3) // 4, 96 * 1024 * 1024)
    block_budget = vmem_limit // 2

    per_row = n_io_streams * 2 * D * int(itemsize) + n_f32_temps * D * 4
    tm = max(8, block_budget // max(per_row, 1))
    tm = min(tm, 1024)                       # 512-1024 rows ~ HBM roofline sweet spot
    tm = max(8, _floor8(tm))

    if M <= 8:
        return M, vmem_limit                 # tiny input: full extent is legal

    # Never a single full-extent tile: >=2 grid steps so the pipeline overlaps
    # and both v7x TensorCores get work; aim for ~8 steps but do not shrink
    # below ~512 rows (roofline) just to manufacture steps.
    two_step_cap = max(8, _floor8(pl.cdiv(M, 2)))
    eight_step_cap = max(8, _floor8(pl.cdiv(M, 8)))
    tm = min(tm, two_step_cap, max(512, eight_step_cap))
    tm = max(8, _floor8(tm))
    return tm, vmem_limit


# ------------------------------- wrappers ----------------------------------- #

def layer_norm(x, gamma, beta, *, eps=1e-5):
    """LayerNorm over the last dim of x (any leading shape) as a Pallas kernel."""
    orig_shape = x.shape
    D = orig_shape[-1]
    M = x.size // D
    x2 = x.reshape(M, D)
    g2 = gamma.reshape(1, D)
    b2 = beta.reshape(1, D)

    tm, vmem_limit = _pick_row_tile(M, D, x.dtype.itemsize)
    grid = (pl.cdiv(M, tm),)

    y2 = pl.pallas_call(
        functools.partial(_layernorm_kernel, eps=eps),
        out_shape=jax.ShapeDtypeStruct((M, D), x.dtype),
        grid_spec=pltpu.PrefetchScalarGridSpec(
            num_scalar_prefetch=0,
            grid=grid,
            in_specs=[
                pl.BlockSpec((tm, D), lambda i: (i, 0)),
                pl.BlockSpec((1, D), lambda i: (0, 0)),
                pl.BlockSpec((1, D), lambda i: (0, 0)),
            ],
            out_specs=pl.BlockSpec((tm, D), lambda i: (i, 0)),
        ),
        compiler_params=pltpu.CompilerParams(
            dimension_semantics=("parallel",),
            vmem_limit_bytes=int(vmem_limit),
        ),
    )(x2, g2, b2)
    return y2.reshape(orig_shape)


def pre_norm_attention(x, gamma, beta, fn, *, eps=1e-5, **kwargs):
    """PyTorch PreNormattention.forward:  fn(LayerNorm(x)) + x."""
    normed = layer_norm(x, gamma, beta, eps=eps)
    # TODO(synk): `fn` is an arbitrary user-supplied sub-module (attention in the
    # original model), so it is applied as a plain JAX callable, not a Pallas kernel.
    # The residual add is left to XLA on purpose so it fuses into fn's epilogue
    # (a separate bandwidth-bound Pallas add would block that fusion).
    return fn(normed, **kwargs) + x


# --------------------------------- demo ------------------------------------- #

if __name__ == "__main__":
    key = jax.random.PRNGKey(0)
    k_x, k_g, k_b, k_q, k_k, k_v, k_o = jax.random.split(key, 7)

    B, N, D = 2, 8, 32       # batch=2, seq=8, hidden(dim)=32

    x = jax.random.normal(k_x, (B, N, D), dtype=jnp.float32)
    gamma = 1.0 + 0.1 * jax.random.normal(k_g, (D,), dtype=jnp.float32)
    beta = 0.1 * jax.random.normal(k_b, (D,), dtype=jnp.float32)

    # Demo `fn`: a small single-head softmax self-attention (plain JAX), standing
    # in for the attention sub-module the original model passes into PreNormattention.
    scale = 0.02
    Wq = scale * jax.random.normal(k_q, (D, D), dtype=jnp.float32)
    Wk = scale * jax.random.normal(k_k, (D, D), dtype=jnp.float32)
    Wv = scale * jax.random.normal(k_v, (D, D), dtype=jnp.float32)
    Wo = scale * jax.random.normal(k_o, (D, D), dtype=jnp.float32)

    def attention_fn(h):
        q = h @ Wq
        k = h @ Wk
        v = h @ Wv
        logits = jnp.einsum("bqd,bkd->bqk", q, k) * (D ** -0.5)
        attn = jax.nn.softmax(logits, axis=-1)
        return jnp.einsum("bqk,bkd->bqd", attn, v) @ Wo

    y = pre_norm_attention(x, gamma, beta, attention_fn)
    y = jax.block_until_ready(y)

    # -------- reference (plain JAX, same math as the PyTorch module) -------- #
    mean = jnp.mean(x, axis=-1, keepdims=True)
    var = jnp.mean((x - mean) ** 2, axis=-1, keepdims=True)
    normed_ref = (x - mean) * jax.lax.rsqrt(var + 1e-5) * gamma + beta
    ref = attention_fn(normed_ref) + x

    assert y.shape == (B, N, D)
    assert jnp.allclose(y, ref, atol=1e-5, rtol=1e-5)

    print("KERNEL_OK")
</pallas_src>

<mosaic_0001>
module attributes {stable_mosaic.version = 11 : i64} {
  func.func @_layernorm_kernel(%arg0: i32, %arg1: memref<8x32xf32, #tpu.memory_space<vmem>>, %arg2: memref<1x32xf32, #tpu.memory_space<vmem>>, %arg3: memref<1x32xf32, #tpu.memory_space<vmem>>, %arg4: memref<8x32xf32, #tpu.memory_space<vmem>>) attributes {dimension_semantics = [#tpu.dimension_semantics<parallel>], iteration_bounds = array<i64: 2>, scalar_prefetch = 0 : i64, scratch_operands = 0 : i64, tpu.core_type = #tpu.core_type<tc>, window_params = [{transform_indices = @transform_0, window_bounds = array<i64: 8, 32>}, {pipeline_mode = #tpu.pipeline_mode<synchronous>, transform_indices = @transform_1, window_bounds = array<i64: 1, 32>}, {pipeline_mode = #tpu.pipeline_mode<synchronous>, transform_indices = @transform_2, window_bounds = array<i64: 1, 32>}, {transform_indices = @transform_3, window_bounds = array<i64: 8, 32>}]} {
    %c0 = arith.constant 0 : index
    %c0_0 = arith.constant 0 : index
    %0 = vector.load %arg1[%c0, %c0_0] : memref<8x32xf32, #tpu.memory_space<vmem>>, vector<8x32xf32>
    %c0_1 = arith.constant 0 : index
    %c0_2 = arith.constant 0 : index
    %1 = vector.load %arg2[%c0_1, %c0_2] : memref<1x32xf32, #tpu.memory_space<vmem>>, vector<1x32xf32>
    %c0_3 = arith.constant 0 : index
    %c0_4 = arith.constant 0 : index
    %2 = vector.load %arg3[%c0_3, %c0_4] : memref<1x32xf32, #tpu.memory_space<vmem>>, vector<1x32xf32>
    %cst = arith.constant dense<0.000000e+00> : vector<8xf32>
    %3 = vector.multi_reduction <add>, %0, %cst [1] : vector<8x32xf32> to vector<8xf32>
    %4 = vector.shape_cast %3 : vector<8xf32> to vector<8x1xf32>
    %cst_5 = arith.constant 3.200000e+01 : f32
    %5 = vector.broadcast %cst_5 : f32 to vector<8x1xf32>
    %6 = arith.divf %4, %5 : vector<8x1xf32>
    %7 = arith.mulf %0, %0 : vector<8x32xf32>
    %cst_6 = arith.constant dense<0.000000e+00> : vector<8xf32>
    %8 = vector.multi_reduction <add>, %7, %cst_6 [1] : vector<8x32xf32> to vector<8xf32>
    %9 = vector.shape_cast %8 : vector<8xf32> to vector<8x1xf32>
    %cst_7 = arith.constant 3.200000e+01 : f32
    %10 = vector.broadcast %cst_7 : f32 to vector<8x1xf32>
    %11 = arith.divf %9, %10 : vector<8x1xf32>
    %12 = arith.mulf %6, %6 : vector<8x1xf32>
    %13 = arith.subf %11, %12 : vector<8x1xf32>
    %cst_8 = arith.constant 0.000000e+00 : f32
    %14 = vector.broadcast %cst_8 : f32 to vector<8x1xf32>
    %15 = arith.maximumf %13, %14 : vector<8x1xf32>
    %cst_9 = arith.constant 9.99999974E-6 : f32
    %16 = vector.broadcast %cst_9 : f32 to vector<8x1xf32>
    %17 = arith.addf %15, %16 : vector<8x1xf32>
    %18 = math.rsqrt %17 : vector<8x1xf32>
    %19 = vector.broadcast %18 : vector<8x1xf32> to vector<8x32xf32>
    %20 = vector.broadcast %1 : vector<1x32xf32> to vector<8x32xf32>
    %21 = arith.mulf %19, %20 : vector<8x32xf32>
    %22 = vector.broadcast %6 : vector<8x1xf32> to vector<8x32xf32>
    %23 = arith.mulf %22, %21 : vector<8x32xf32>
    %24 = vector.broadcast %2 : vector<1x32xf32> to vector<8x32xf32>
    %25 = arith.subf %24, %23 : vector<8x32xf32>
    %26 = arith.mulf %0, %21 : vector<8x32xf32>
    %27 = arith.addf %26, %25 : vector<8x32xf32>
    %c0_10 = arith.constant 0 : index
    %c0_11 = arith.constant 0 : index
    %28 = vector.load %arg4[%c0_10, %c0_11] : memref<8x32xf32, #tpu.memory_space<vmem>>, vector<8x32xf32>
    tpu.vector_store %arg4[%c0_10, %c0_11], %27 {strides = array<i32>} : memref<8x32xf32, #tpu.memory_space<vmem>>, vector<8x32xf32>,
    return
  }
  func.func @transform_0(%arg0: i32) -> (i32, i32) {
    %c0_i32 = arith.constant 0 : i32
    %c0_i32_0 = arith.constant 0 : i32
    return %arg0, %c0_i32 : i32, i32
  }
  func.func @transform_1(%arg0: i32) -> (i32, i32) {
    %c0_i32 = arith.constant 0 : i32
    %c0_i32_0 = arith.constant 0 : i32
    %c0_i32_1 = arith.constant 0 : i32
    return %c0_i32, %c0_i32_0 : i32, i32
  }
  func.func @transform_2(%arg0: i32) -> (i32, i32) {
    %c0_i32 = arith.constant 0 : i32
    %c0_i32_0 = arith.constant 0 : i32
    %c0_i32_1 = arith.constant 0 : i32
    return %c0_i32, %c0_i32_0 : i32, i32
  }
  func.func @transform_3(%arg0: i32) -> (i32, i32) {
    %c0_i32 = arith.constant 0 : i32
    %c0_i32_0 = arith.constant 0 : i32
    return %arg0, %c0_i32 : i32, i32
  }
}

</mosaic_0001>

<llo_original>
// kernel: tpu_custom_call.1
$region0: #{tpu_custom_call.1}
  #allocation0 [shape = 'u32[]', space=smem, size = 0x4, offset = 0x4, fixed_abs, tag = 'smem constant byte address 0x4 - core index']
  #allocation1 [shape = 'u32[144,128]{1,0:T(1,128)}', space=vmem, size = 0x12000, scoped, tag = 'internal scratch']
  %s0 = inlined_call_operand.hbm [shape: f32[16,32], index: 0, kind: input, shape index: {}]
  %s1 = inlined_call_operand.vmem [shape: f32[1,32], index: 1, kind: input, shape index: {}]
  %s2 = inlined_call_operand.vmem [shape: f32[1,32], index: 2, kind: input, shape index: {}]
  %s3 = inlined_call_operand.hbm [shape: f32[16,32], index: 3, kind: output, shape index: {}]
  %s4 = sld [smem:[#allocation0]]
  $region49: #{tpu_custom_call.1} parent=0
    _
  %s6 = ssub.s32 1, %s4
  %s7 = scalar_select 0, %s6, %s4
  $region1: #{tpu_custom_call.1} parent=0
    #allocation2 [shape = 'u8[8192]{0}', space=vmem, size = 0x2000, scoped, tag = 'input window, operand 0']
    #allocation3 [shape = 's32[2]{0}', space=sflag, size = 0x8, scoped, tag = 'scoped memory for tpu_custom_call.1']
    #allocation4 [shape = 's32[2]{0}', space=sflag, size = 0x8, scoped, tag = 'scoped memory for tpu_custom_call.1']
    #allocation5 [shape = 'u8[8192]{0}', space=vmem, size = 0x2000, scoped, tag = 'output window, operand 0']
    %8 = vsyncpa [#allocation3], 0
    %s9 = scalar_lea.sflag [#allocation3], 1
    %10 = vsyncpa %s9, 0
    %11 = vsyncpa [#allocation4], 0
    %s12 = scalar_lea.sflag [#allocation4], 1
    %13 = vsyncpa %s12, 0
    loop: start=0, step=1, limit=4
    $region2: #{tpu_custom_call.1} parent=1 // loop_pre_header
      _
    $region3: #{tpu_custom_call.1} parent=1 // loop_header
      %s15 = sphi 0, %s19
      %p16 = scmp.ge.s32.totalorder %s15, 4
      %s25 = sphi 0, %s27
      %s28 = sphi 0, %s25
      %s29 = sphi 0, %s28
      %s45 = sphi 0, %s29
      %s49 = sphi 0, %s49
      %s51 = sphi 0, %s49
      %s52 = sphi 0, %s51
      %s66 = sphi 0, %s52
      %s70 = sphi 0, %s70
      %s72 = sphi 0, %s70
      %s73 = sphi 0, %s72
      %s87 = sphi 0, %s73
      %s93 = sphi 0, %s95
      %s96 = sphi 0, %s93
      %s97 = sphi 0, %s96
      %s113 = sphi 0, %s97
    $region4: #{tpu_custom_call.1} parent=1 // loop_header_branch
      %18 = sbr.rel (%p16) target = $region8
    $region5: #{tpu_custom_call.1} parent=1 // loop_body
      %s20 = ssub.s32 %s15, 1
      %s21 = ssub.s32 %s15, 2
      %s22 = sadd.s32 %s15, 1
      %s23 = ssub.s32 %s15, %s22
      %p24 = scmp.eq.s32.totalorder %s23, 0
      %s26 = sadd.s32 %s25, 1
      %s27 = scalar_select %p24, %s25, %s26
      %p30 = pneg %p24
      %p31 = scmp.eq.s32.totalorder %s15, 1
      %p32 = por %p30, %p31
      %p33 = scmp.ne.s32.totalorder %s25, %s28
      %p34 = scmp.eq.s32.totalorder %s15, 0
      %p35 = por %p33, %p34
      %p36 = scmp.ne.s32.totalorder %s25, %s28
      %p37 = scmp.eq.s32.totalorder %s20, 1
      %p38 = por %p36, %p37
      %p39 = scmp.ne.s32.totalorder %s28, %s29
      %p40 = scmp.eq.s32.totalorder %s20, 0
      %p41 = por %p39, %p40
      %p42 = scmp.ne.s32.totalorder %s28, %s29
      %p43 = scmp.eq.s32.totalorder %s21, 1
      %p44 = por %p42, %p43
      %p46 = scmp.ne.s32.totalorder %s29, %s45
      %p47 = scmp.eq.s32.totalorder %s21, 0
      %p48 = por %p46, %p47
      %s50 = sadd.s32 %s49, 1
      %p53 = scmp.eq.s32.totalorder %s15, 1
      %p54 = scmp.ne.s32.totalorder %s49, %s51
      %p55 = scmp.eq.s32.totalorder %s15, 0
      %p56 = por %p54, %p55
      %p57 = scmp.ne.s32.totalorder %s49, %s51
      %p58 = scmp.eq.s32.totalorder %s20, 1
      %p59 = por %p57, %p58
      %p60 = scmp.ne.s32.totalorder %s51, %s52
      %p61 = scmp.eq.s32.totalorder %s20, 0
      %p62 = por %p60, %p61
      %p63 = scmp.ne.s32.totalorder %s51, %s52
      %p64 = scmp.eq.s32.totalorder %s21, 1
      %p65 = por %p63, %p64
      %p67 = scmp.ne.s32.totalorder %s52, %s66
      %p68 = scmp.eq.s32.totalorder %s21, 0
      %p69 = por %p67, %p68
      %s71 = sadd.s32 %s70, 1
      %p74 = scmp.eq.s32.totalorder %s15, 1
      %p75 = scmp.ne.s32.totalorder %s70, %s72
      %p76 = scmp.eq.s32.totalorder %s15, 0
      %p77 = por %p75, %p76
      %p78 = scmp.ne.s32.totalorder %s70, %s72
      %p79 = scmp.eq.s32.totalorder %s20, 1
      %p80 = por %p78, %p79
      %p81 = scmp.ne.s32.totalorder %s72, %s73
      %p82 = scmp.eq.s32.totalorder %s20, 0
      %p83 = por %p81, %p82
      %p84 = scmp.ne.s32.totalorder %s72, %s73
      %p85 = scmp.eq.s32.totalorder %s21, 1
      %p86 = por %p84, %p85
      %p88 = scmp.ne.s32.totalorder %s73, %s87
      %p89 = scmp.eq.s32.totalorder %s21, 0
      %p90 = por %p88, %p89
      %s91 = ssub.s32 %s15, %s22
      %p92 = scmp.eq.s32.totalorder %s91, 0
      %s94 = sadd.s32 %s93, 1
      %s95 = scalar_select %p92, %s93, %s94
      %p98 = pneg %p92
      %p99 = scmp.eq.s32.totalorder %s15, 1
      %p100 = por %p98, %p99
      %p101 = scmp.ne.s32.totalorder %s93, %s96
      %p102 = scmp.eq.s32.totalorder %s15, 0
      %p103 = por %p101, %p102
      %p104 = scmp.ne.s32.totalorder %s93, %s96
      %p105 = scmp.eq.s32.totalorder %s20, 1
      %p106 = por %p104, %p105
      %p107 = scmp.ne.s32.totalorder %s96, %s97
      %p108 = scmp.eq.s32.totalorder %s20, 0
      %p109 = por %p107, %p108
      %p110 = scmp.ne.s32.totalorder %s96, %s97
      %p111 = scmp.eq.s32.totalorder %s21, 1
      %p112 = por %p110, %p111
      %p114 = scmp.ne.s32.totalorder %s97, %s113
      %p115 = scmp.eq.s32.totalorder %s21, 0
      %p116 = por %p114, %p115
      %p117 = scmp.le.s32.totalorder 1, %s15
      %p118 = scmp.lt.s32.totalorder %s15, 3
      %p119 = pnand %p117, %p118
      %p120 = pneg %p119
      // Predicated region
      $region9: #{tpu_custom_call.1} parent=5 // pred_check
        _
      $region10: #{tpu_custom_call.1} parent=5 // pred_check_branch
        %122 = sbr.rel (%p119) target = $region12
      $region11: #{tpu_custom_call.1} parent=5 // pred_region
        %s123 = ssub.s32 %s15, 1
        // Predicated region
        $region13: #{tpu_custom_call.1} parent=11 // pred_check
          %p124 = pneg %p62
        $region14: #{tpu_custom_call.1} parent=11 // pred_check_branch
          %126 = sbr.rel (%p124) target = $region16
        $region15: #{tpu_custom_call.1} parent=11 // pred_region
          _
        $region16: #{tpu_custom_call.1} parent=11 // pred_fallthru
          _
        // Predicated region
        $region17: #{tpu_custom_call.1} parent=11 // pred_check
          %p127 = pneg %p83
        $region18: #{tpu_custom_call.1} parent=11 // pred_check_branch
          %129 = sbr.rel (%p127) target = $region20
        $region19: #{tpu_custom_call.1} parent=11 // pred_region
          _
        $region20: #{tpu_custom_call.1} parent=11 // pred_fallthru
          _
      $region12: #{tpu_custom_call.1} parent=5 // pred_fallthru
        _
      %p130 = scmp.lt.s32.totalorder %s15, 2
      // Predicated region
      $region21: #{tpu_custom_call.1} parent=5 // pred_check
        %p131 = pneg %p130
      $region22: #{tpu_custom_call.1} parent=5 // pred_check_branch
        %133 = sbr.rel (%p131) target = $region24
      $region23: #{tpu_custom_call.1} parent=5 // pred_region
        // Predicated region
        $region25: #{tpu_custom_call.1} parent=23 // pred_check
          %p134 = pneg %p35
        $region26: #{tpu_custom_call.1} parent=23 // pred_check_branch
          %136 = sbr.rel (%p134) target = $region28
        $region27: #{tpu_custom_call.1} parent=23 // pred_region
          %s137 = sand.u32 %s25, 1
          %s138 = scalar_lea.sflag [#allocation3], %s137
          %s139 = sand.u32 %s25, 1
          %s140 = smul.addr %s139, 8
          %s141 = scalar_lea.vmem [#allocation2], %s140
          %s143 = ssub.s32 128, 128
          %144 = vsyncadd %s138, %s143
          %s145 = smul.addr %s15, 128
          %s146 = scalar_lea.hbm %s0, %s145
          %s148 = sshll.u32 %s141, 4
          %s149 = int_to_ptr.vmem [resolvable:$true] %s148
          %151 = dma.hbm_to_vmem [thread:$0]  %s146, 128, %s149, %s138
        $region28: #{tpu_custom_call.1} parent=23 // pred_fallthru
          _
      $region24: #{tpu_custom_call.1} parent=5 // pred_fallthru
        _
      %p152 = scmp.le.s32.totalorder 1, %s15
      %p153 = scmp.lt.s32.totalorder %s15, 3
      %p154 = pnand %p152, %p153
      %p155 = pneg %p154
      // Predicated region
      $region29: #{tpu_custom_call.1} parent=5 // pred_check
        _
      $region30: #{tpu_custom_call.1} parent=5 // pred_check_branch
        %157 = sbr.rel (%p154) target = $region32
      $region31: #{tpu_custom_call.1} parent=5 // pred_region
        %s158 = ssub.s32 %s15, 1
        %s159 = sand.u32 %s28, 1
        %s160 = scalar_lea.sflag [#allocation3], %s159
        %s161 = sand.u32 %s28, 1
        %s162 = smul.addr %s161, 8
        %s163 = scalar_lea.vmem [#allocation2], %s162
        // Predicated region
        $region33: #{tpu_custom_call.1} parent=31 // pred_check
          %p164 = pneg %p41
        $region34: #{tpu_custom_call.1} parent=31 // pred_check_branch
          %166 = sbr.rel (%p164) target = $region36
        $region35: #{tpu_custom_call.1} parent=31 // pred_region
          %167 = dma.done %s160, 128
        $region36: #{tpu_custom_call.1} parent=31 // pred_fallthru
          _
        %s168 = sand.u32 %s28, 1
        %s169 = scalar_lea.sflag [#allocation3], %s168
        %s170 = sand.u32 %s28, 1
        %s171 = smul.addr %s170, 8
        %s172 = scalar_lea.vmem [#allocation2], %s171
        %p173 = pneg %p41
        %p174 = pneg %p38
        %p175 = pneg %p62
        %p176 = pneg %p59
        %p177 = pneg %p83
        %p178 = pneg %p80
        %p179 = pneg %p109
        %p180 = pneg %p106
        %s181 = sand.u32 %s96, 1
        %s182 = scalar_lea.sflag [#allocation4], %s181
        %s183 = sand.u32 %s96, 1
        %s184 = smul.addr %s183, 8
        %s185 = scalar_lea.vmem [#allocation5], %s184
        %v186 = vld [vmem:[%s163] sm:$0xff]
        %v187 = vld [vmem:[%s1] sm:$0x1]
        %v188 = vld [vmem:[%s2] sm:$0x1]
        %vm189 = vcmask 261120
        %v190 = vsel %vm189, %v186, 0.0
        %191 = vadd.xlane.f32.xlu0 %v190
        %v192 = vpop.xlane.xlu0 %191
        %v193 = vrcp.pop 32.0
        %v194 = vmul.f32 %v192, %v193
        %v195 = vmul.f32 %v186, %v186
        %v196 = vsel %vm189, %v195, 0.0
        %197 = vadd.xlane.f32.xlu0 %v196
        %v198 = vpop.xlane.xlu0 %197
        %v199 = vmul.f32 %v198, %v193
        %v200 = vmul.f32 %v194, %v194
        %v201 = vsub.f32 %v199, %v200
        %v202 = vmax.f32 %v201, 0.0
        %v203 = vadd.f32 %v202, 1e-05
        %v204 = vrsqrt.pop %v203
        %v206 = vlaneseq
        %v207 = vshrl.u32 %v206, 7
        %v208 = vsub.s32 0, %v207
        %v209 = vrot.slane %v187, %v208
        %v211 = vmul.f32 %v204, %v209
        %v212 = vmul.f32 %v194, %v211
        %v214 = vlaneseq
        %v215 = vshrl.u32 %v214, 7
        %v216 = vsub.s32 0, %v215
        %v217 = vrot.slane %v188, %v216
        %v219 = vsub.f32 %v217, %v212
        %v220 = vmul.f32 %v186, %v211
        %v221 = vadd.f32 %v220, %v219
        %222 = vst.msk [vmem:[%s185] sm:$0xff] %vm189, %v221
        %s223 = sand.u32 %s96, 1
        %s224 = scalar_lea.sflag [#allocation4], %s223
        %s225 = sand.u32 %s96, 1
        %s226 = smul.addr %s225, 8
        %s227 = scalar_lea.vmem [#allocation5], %s226
        // Predicated region
        $region37: #{tpu_custom_call.1} parent=31 // pred_check
          %p228 = pneg %p106
        $region38: #{tpu_custom_call.1} parent=31 // pred_check_branch
          %230 = sbr.rel (%p228) target = $region40
        $region39: #{tpu_custom_call.1} parent=31 // pred_region
          %s232 = ssub.s32 128, 128
          %233 = vsyncadd %s224, %s232
          %s234 = smul.addr %s20, 128
          %s235 = scalar_lea.hbm %s3, %s234
          %s237 = sshll.u32 %s227, 4
          %s238 = int_to_ptr.vmem [resolvable:$true] %s237
          %240 = dma.vmem_to_hbm [thread:$0]  %s238, 128, %s235, %s224
        $region40: #{tpu_custom_call.1} parent=31 // pred_fallthru
          _
      $region32: #{tpu_custom_call.1} parent=5 // pred_fallthru
        _
      %p241 = scmp.le.s32.totalorder 2, %s15
      // Predicated region
      $region41: #{tpu_custom_call.1} parent=5 // pred_check
        %p242 = pneg %p241
      $region42: #{tpu_custom_call.1} parent=5 // pred_check_branch
        %244 = sbr.rel (%p242) target = $region44
      $region43: #{tpu_custom_call.1} parent=5 // pred_region
        %s245 = ssub.s32 %s15, 2
        // Predicated region
        $region45: #{tpu_custom_call.1} parent=43 // pred_check
          %p246 = pneg %p112
        $region46: #{tpu_custom_call.1} parent=43 // pred_check_branch
          %248 = sbr.rel (%p246) target = $region48
        $region47: #{tpu_custom_call.1} parent=43 // pred_region
          %s249 = sand.u32 %s97, 1
          %s250 = scalar_lea.sflag [#allocation4], %s249
          %s251 = sand.u32 %s97, 1
          %s252 = smul.addr %s251, 8
          %s253 = scalar_lea.vmem [#allocation5], %s252
          %254 = dma.done %s250, 128
        $region48: #{tpu_custom_call.1} parent=43 // pred_fallthru
          _
      $region44: #{tpu_custom_call.1} parent=5 // pred_fallthru
        _
    $region6: #{tpu_custom_call.1} parent=1 // loop_footer
      %s19 = sadd.s32 1, %s15
    $region7: #{tpu_custom_call.1} parent=1 // loop_footer_branch
      %14 = sbr.rel target = $region3
    $region8: #{tpu_custom_call.1} parent=1 // loop_exit
      _
    %255 = vsyncpa [#allocation3], 1
    %s256 = scalar_lea.sflag [#allocation3], 1
    %257 = vsyncpa %s256, 1
    %258 = vsyncpa [#allocation4], 1
    %s259 = scalar_lea.sflag [#allocation4], 1
    %260 = vsyncpa %s259, 1

</llo_original>
